<compile_context>
chip_gen: v7x
topology: tpu7x:2x2x1
jax: 0.10.0
libtpu: 0.0.40
codegen_flags: <defaults>
</compile_context>

<pallas_src>
import jax
import jax.numpy as jnp
from jax.experimental import pallas as pl
from jax.experimental.pallas import tpu as pltpu


def _round_up(x: int, m: int) -> int:
    return ((x + m - 1) // m) * m


# ---------------------------------------------------------------------------
# Kernels
# ---------------------------------------------------------------------------

def _linear_single_block_kernel(x_ref, w_ref, b_ref, o_ref):
    # Whole K and N in one block: one MXU pass (f32 accumulate) + bias add.
    o_ref[...] = (
        jnp.dot(x_ref[...], w_ref[...], preferred_element_type=jnp.float32)
        + b_ref[...]
    ).astype(o_ref.dtype)


def _linear_tiled_kernel(x_ref, w_ref, b_ref, o_ref):
    # Output block is resident across the k (reduction) axis, so accumulate
    # directly into the f32 output ref — no separate VMEM scratch accumulator.
    @pl.when(pl.program_id(2) == 0)
    def _init():
        o_ref[...] = jnp.broadcast_to(b_ref[...], o_ref.shape).astype(o_ref.dtype)

    o_ref[...] += jnp.dot(
        x_ref[...], w_ref[...], preferred_element_type=jnp.float32
    )


# ---------------------------------------------------------------------------
# Wrapper
# ---------------------------------------------------------------------------

def make_simple_model_forward(
    weight,
    bias,
    *,
    tn=None,
    tk=None,
    tm_cap=512,
    compute_dtype=jnp.bfloat16,
    vmem_limit_bytes=32 * 1024 * 1024,
):
    """Prepare nn.Linear parameters once and return `forward(x) = x @ W.T + b`.

    All parameter-side layout plumbing (transpose to (K, N), padding, dtype
    cast, bias reshape) happens here exactly once, not per forward call.
    """
    N, K = weight.shape
    assert bias.shape == (N,), "bias must be (out_features,)"

    sub = 16 if compute_dtype == jnp.bfloat16 else 8
    itemsize = jnp.dtype(compute_dtype).itemsize

    # Lane-dense tile defaults (multiples of 128; 256-multiples for the
    # 2x256^2 MXU on v6e/v7x).  Double-buffered budget stays a few MiB, safe
    # under v7x's 64 MiB physical / 32 MiB scoped-default VMEM.
    if tk is None:
        tk = min(1024, _round_up(K, 128))
    if tn is None:
        tn = min(512, _round_up(N, 128))

    # One-time weight layout: (out, in) -> (in, out) so the in-kernel matmul
    # is the canonical MXU form and N is the lane axis of the result.
    w_t = weight.T.astype(compute_dtype)            # (K, N)
    b2d = bias.reshape(1, N).astype(jnp.float32)    # (1, N)

    single_block = (K <= tk) and (N <= tn)

    if single_block:
        Kp, Np = K, N                               # full-extent blocks, no pad
    else:
        Kp, Np = _round_up(K, tk), _round_up(N, tn)
        if (Kp, Np) != (K, N):
            w_t = jnp.pad(w_t, ((0, Kp - K), (0, Np - N)))
        if Np != N:
            b2d = jnp.pad(b2d, ((0, 0), (0, Np - N)))

    def forward(x):
        B, K_x = x.shape
        assert K_x == K, "x must be (batch, in_features)"
        x_c = x.astype(compute_dtype)

        if single_block:
            # Fast path: M-only grid, full-extent K/N blocks, weight streamed
            # once, no pad/slice round trips for typical batch sizes.
            tm = B if B <= tm_cap else tm_cap
            Mp = _round_up(B, tm)
            if Mp != B:
                x_c = jnp.pad(x_c, ((0, Mp - B), (0, 0)))
            grid_m = Mp // tm

            out = pl.pallas_call(
                _linear_single_block_kernel,
                out_shape=jax.ShapeDtypeStruct((Mp, N), jnp.float32),
                grid=(grid_m,),
                in_specs=[
                    pl.BlockSpec((tm, K), lambda i: (i, 0)),   # x tile
                    pl.BlockSpec((K, N), lambda i: (0, 0)),    # W.T (resident)
                    pl.BlockSpec((1, N), lambda i: (0, 0)),    # bias (resident)
                ],
                out_specs=pl.BlockSpec((tm, N), lambda i: (i, 0)),
                compiler_params=pltpu.CompilerParams(
                    dimension_semantics=("parallel",),
                    vmem_limit_bytes=vmem_limit_bytes,
                ),
                cost_estimate=pl.CostEstimate(
                    flops=2 * Mp * K * N,
                    transcendentals=0,
                    bytes_accessed=(itemsize * Mp * K
                                    + itemsize * K * N
                                    + 4 * N
                                    + 4 * Mp * N),
                ),
            )(x_c, w_t, b2d)
            return out[:B] if Mp != B else out

        # Tiled path: (M, N, K) grid with the reduction axis last.
        tm = min(tm_cap, _round_up(B, sub))
        Mp = _round_up(B, tm)
        if (Mp, Kp) != (B, K):
            x_c = jnp.pad(x_c, ((0, Mp - B), (0, Kp - K)))
        grid = (Mp // tm, Np // tn, Kp // tk)

        out = pl.pallas_call(
            _linear_tiled_kernel,
            out_shape=jax.ShapeDtypeStruct((Mp, Np), jnp.float32),
            grid=grid,
            in_specs=[
                pl.BlockSpec((tm, tk), lambda i, j, k: (i, k)),   # x tile
                pl.BlockSpec((tk, tn), lambda i, j, k: (k, j)),   # W.T tile
                pl.BlockSpec((1, tn), lambda i, j, k: (0, j)),    # bias tile
            ],
            out_specs=pl.BlockSpec((tm, tn), lambda i, j, k: (i, j)),
            compiler_params=pltpu.CompilerParams(
                dimension_semantics=("parallel", "parallel", "arbitrary"),
                vmem_limit_bytes=vmem_limit_bytes,
            ),
            cost_estimate=pl.CostEstimate(
                flops=2 * Mp * Kp * Np,
                transcendentals=0,
                # W is re-streamed once per M block (its index_map is (k, j)).
                bytes_accessed=(itemsize * Mp * Kp
                                + itemsize * Kp * Np * (Mp // tm)
                                + 4 * Np
                                + 4 * Mp * Np),
            ),
        )(x_c, w_t, b2d)
        return out[:B, :N]

    return forward


def simple_model_forward(x, weight, bias, **kwargs):
    """One-shot convenience wrapper: y = x @ weight.T + bias."""
    return make_simple_model_forward(weight, bias, **kwargs)(x)


# ---------------------------------------------------------------------------
# Self-test
# ---------------------------------------------------------------------------

if __name__ == "__main__":
    key = jax.random.PRNGKey(0)
    kx, kw, kb, kx2, kw2, kb2 = jax.random.split(key, 6)

    # --- SimpleModel(input_size=32, output_size=16), batch=8 (toy) ----------
    batch, input_size, output_size = 8, 32, 16
    x = jax.random.normal(kx, (batch, input_size), dtype=jnp.float32)
    bound = 1.0 / jnp.sqrt(jnp.float32(input_size))
    weight = jax.random.uniform(
        kw, (output_size, input_size), dtype=jnp.float32,
        minval=-bound, maxval=bound)
    bias = jax.random.uniform(
        kb, (output_size,), dtype=jnp.float32, minval=-bound, maxval=bound)

    y_ref = x @ weight.T + bias

    # bf16 inputs / f32 accumulation (default, single-block fast path).
    fwd = make_simple_model_forward(weight, bias)
    y = fwd(x)
    jax.block_until_ready(y)
    assert y.shape == (batch, output_size)
    assert jnp.allclose(y, y_ref, atol=3e-2, rtol=3e-2)

    # f32 compute path: bit-tight check of the same kernel.
    y32 = make_simple_model_forward(weight, bias, compute_dtype=jnp.float32)(x)
    jax.block_until_ready(y32)
    assert jnp.allclose(y32, y_ref, atol=1e-5, rtol=1e-5)

    # --- Exercise the multi-block (K-reduction) tiled path at small shapes --
    B2, K2, N2 = 24, 384, 256
    x2 = jax.random.normal(kx2, (B2, K2), dtype=jnp.float32)
    bound2 = 1.0 / jnp.sqrt(jnp.float32(K2))
    w2 = jax.random.uniform(kw2, (N2, K2), dtype=jnp.float32,
                            minval=-bound2, maxval=bound2)
    bz2 = jax.random.uniform(kb2, (N2,), dtype=jnp.float32,
                             minval=-bound2, maxval=bound2)
    y2 = make_simple_model_forward(w2, bz2, tn=128, tk=128)(x2)  # grid (1,2,3)
    jax.block_until_ready(y2)
    y2_ref = x2 @ w2.T + bz2
    assert y2.shape == (B2, N2)
    assert jnp.allclose(y2, y2_ref, atol=3e-2, rtol=3e-2)

    print("KERNEL_OK")
</pallas_src>

<mosaic_0001>
module attributes {stable_mosaic.version = 11 : i64} {
  func.func @_linear_single_block_kernel(%arg0: i32, %arg1: memref<8x32xbf16, #tpu.memory_space<vmem>>, %arg2: memref<32x16xbf16, #tpu.memory_space<vmem>>, %arg3: memref<1x16xf32, #tpu.memory_space<vmem>>, %arg4: memref<8x16xf32, #tpu.memory_space<vmem>>) attributes {dimension_semantics = [#tpu.dimension_semantics<parallel>], iteration_bounds = array<i64: 1>, scalar_prefetch = 0 : i64, scratch_operands = 0 : i64, tpu.core_type = #tpu.core_type<tc>, window_params = [{transform_indices = @transform_0, window_bounds = array<i64: 8, 32>}, {pipeline_mode = #tpu.pipeline_mode<synchronous>, transform_indices = @transform_1, window_bounds = array<i64: 32, 16>}, {pipeline_mode = #tpu.pipeline_mode<synchronous>, transform_indices = @transform_2, window_bounds = array<i64: 1, 16>}, {transform_indices = @transform_3, window_bounds = array<i64: 8, 16>}]} {
    %c0 = arith.constant 0 : index
    %c0_0 = arith.constant 0 : index
    %0 = vector.load %arg1[%c0, %c0_0] : memref<8x32xbf16, #tpu.memory_space<vmem>>, vector<8x32xbf16>
    %c0_1 = arith.constant 0 : index
    %c0_2 = arith.constant 0 : index
    %1 = vector.load %arg2[%c0_1, %c0_2] : memref<32x16xbf16, #tpu.memory_space<vmem>>, vector<32x16xbf16>
    %cst = arith.constant dense<0.000000e+00> : vector<8x16xf32>
    %2 = tpu.matmul %0, %1, %cst {dimension_numbers = #tpu.dot_dimension_numbers<[1], [0], [0], [1], [0, 0, 1, 1], [], []>} : vector<8x32xbf16>, vector<32x16xbf16>, vector<8x16xf32> -> vector<8x16xf32>
    %c0_3 = arith.constant 0 : index
    %c0_4 = arith.constant 0 : index
    %3 = vector.load %arg3[%c0_3, %c0_4] : memref<1x16xf32, #tpu.memory_space<vmem>>, vector<1x16xf32>
    %4 = vector.broadcast %3 : vector<1x16xf32> to vector<8x16xf32>
    %5 = arith.addf %2, %4 : vector<8x16xf32>
    %c0_5 = arith.constant 0 : index
    %c0_6 = arith.constant 0 : index
    %6 = vector.load %arg4[%c0_5, %c0_6] : memref<8x16xf32, #tpu.memory_space<vmem>>, vector<8x16xf32>
    tpu.vector_store %arg4[%c0_5, %c0_6], %5 {strides = array<i32>} : memref<8x16xf32, #tpu.memory_space<vmem>>, vector<8x16xf32>,
    return
  }
  func.func @transform_0(%arg0: i32) -> (i32, i32) {
    %c0_i32 = arith.constant 0 : i32
    %c0_i32_0 = arith.constant 0 : i32
    return %arg0, %c0_i32 : i32, i32
  }
  func.func @transform_1(%arg0: i32) -> (i32, i32) {
    %c0_i32 = arith.constant 0 : i32
    %c0_i32_0 = arith.constant 0 : i32
    %c0_i32_1 = arith.constant 0 : i32
    return %c0_i32, %c0_i32_0 : i32, i32
  }
  func.func @transform_2(%arg0: i32) -> (i32, i32) {
    %c0_i32 = arith.constant 0 : i32
    %c0_i32_0 = arith.constant 0 : i32
    %c0_i32_1 = arith.constant 0 : i32
    return %c0_i32, %c0_i32_0 : i32, i32
  }
  func.func @transform_3(%arg0: i32) -> (i32, i32) {
    %c0_i32 = arith.constant 0 : i32
    %c0_i32_0 = arith.constant 0 : i32
    return %arg0, %c0_i32 : i32, i32
  }
}

</mosaic_0001>

<llo_original>
// kernel: tpu_custom_call.1
$region0: #{tpu_custom_call.1}
  #allocation0 [shape = 'u32[]', space=smem, size = 0x4, offset = 0x4, fixed_abs, tag = 'smem constant byte address 0x4 - core index']
  #allocation1 [shape = 'u32[144,128]{1,0:T(1,128)}', space=vmem, size = 0x12000, scoped, tag = 'internal scratch']
  %s0 = inlined_call_operand.vmem [shape: bf16[8,32], index: 0, kind: input, shape index: {}]
  %s1 = inlined_call_operand.vmem [shape: bf16[32,16], index: 1, kind: input, shape index: {}]
  %s2 = inlined_call_operand.vmem [shape: f32[1,16], index: 2, kind: input, shape index: {}]
  %s3 = inlined_call_operand.hbm [shape: f32[8,16], index: 3, kind: output, shape index: {}]
  %s4 = sld [smem:[#allocation0]]
  $region22: #{tpu_custom_call.1} parent=0
    _
  %s6 = ssub.s32 1, %s4
  %s7 = scalar_select 0, %s6, %s4
  $region1: #{tpu_custom_call.1} parent=0
    #allocation2 [shape = 'u8[4096]{0}', space=vmem, size = 0x1000, scoped, tag = 'output window, operand 0, single buffered']
    #allocation3 [shape = 's32[1]{0}', space=sflag, size = 0x4, scoped, tag = 'scoped memory for tpu_custom_call.1']
    %8 = vsyncpa [#allocation3], 0
    // Predicated region
    $region2: #{tpu_custom_call.1} parent=1 // pred_check
      _
    $region3: #{tpu_custom_call.1} parent=1 // pred_check_branch
      %10 = sbr.rel (0) target = $region5
    $region4: #{tpu_custom_call.1} parent=1 // pred_region
      _
    $region5: #{tpu_custom_call.1} parent=1 // pred_fallthru
      _
    // Predicated region
    $region6: #{tpu_custom_call.1} parent=1 // pred_check
      _
    $region7: #{tpu_custom_call.1} parent=1 // pred_check_branch
      %12 = sbr.rel (0) target = $region9
    $region8: #{tpu_custom_call.1} parent=1 // pred_region
      _
    $region9: #{tpu_custom_call.1} parent=1 // pred_fallthru
      _
    // Predicated region
    $region10: #{tpu_custom_call.1} parent=1 // pred_check
      _
    $region11: #{tpu_custom_call.1} parent=1 // pred_check_branch
      %14 = sbr.rel (0) target = $region13
    $region12: #{tpu_custom_call.1} parent=1 // pred_region
      _
    $region13: #{tpu_custom_call.1} parent=1 // pred_fallthru
      _
    %v16 = vld [vmem:[%s0] sm:$0xf]
    %v17 = vld [vmem:[%s1] sm:$0xf]
    %v18 = vld [vmem:[%s1 + $0x4] sm:$0xf]
    %v19 = vld [vmem:[%s1 + $0x8] sm:$0xf]
    %v20 = vld [vmem:[%s1 + $0xc] sm:$0xf]
    %v21 = vld [vmem:[%s2] sm:$0x1]
    %v23 = vlaneseq
    %v24 = vshrl.u32 %v23, 7
    %v25 = vsub.s32 0, %v24
    %v26 = vrot.slane %v21, %v25
    %v32 = vunpack.c.l.b16 %v17
    %v33 = vunpack.c.l.b16 %v18
    %v34 = vunpack.c.l.b16 %v19
    %v35 = vunpack.c.l.b16 %v20
    %v36 = vpack.c.b16 %v33, %v32
    %v37 = vpack.c.b16 %v35, %v34
    %vm40 = vcmask 261120
    %v42 = vsel %vm40, %v16, 0
    %44 = vmatprep.subr.bf16.mxu0 0
    %45 = vmatpush1.bf16.msra.mxu0 %v36
    %46 = vmatprep.subr.bf16.mxu0 0
    %47 = vmatpush1.bf16.msra.mxu0 %v37
    %48 = vmatprep.subr.bf16.mxu0 0
    %49 = vmatpush1.bf16.msra.mxu0 0
    %50 = vmatprep.subr.bf16.mxu0 0
    %51 = vmatpush1.bf16.msra.mxu0 0
    %52 = vmatprep.subr.bf16.mxu0 0
    %53 = vmatpush1.bf16.msra.mxu0 0
    %54 = vmatprep.subr.bf16.mxu0 0
    %55 = vmatpush1.bf16.msra.mxu0 0
    %56 = vmatprep.subr.bf16.mxu0 0
    %57 = vmatpush1.bf16.msra.mxu0 0
    %58 = vmatprep.subr.bf16.mxu0 0
    %59 = vmatpush1.bf16.msra.mxu0 0
    %60 = vmatprep.subr.bf16.mxu0 0
    %61 = vmatpush1.bf16.msra.mxu0 0
    %62 = vmatprep.subr.bf16.mxu0 0
    %63 = vmatpush1.bf16.msra.mxu0 0
    %64 = vmatprep.subr.bf16.mxu0 0
    %65 = vmatpush1.bf16.msra.mxu0 0
    %66 = vmatprep.subr.bf16.mxu0 0
    %67 = vmatpush1.bf16.msra.mxu0 0
    %68 = vmatprep.subr.bf16.mxu0 0
    %69 = vmatpush1.bf16.msra.mxu0 0
    %70 = vmatprep.subr.bf16.mxu0 0
    %71 = vmatpush1.bf16.msra.mxu0 0
    %72 = vmatprep.subr.bf16.mxu0 0
    %73 = vmatpush1.bf16.msra.mxu0 0
    %74 = vmatprep.subr.bf16.mxu0 0
    %75 = vmatpush1.bf16.msra.mxu0 0
    %76 = vmatprep.mubr.bf16.mxu0 0
    %77 = vmatmul.mubr.bf16.gmra.mrb[0].mxu0 %v42
    %v78 = vpop.f32.mrb[0].mxu0
    %v79 = vadd.f32 %v26, %v78
    %v80 = vpop.f32.mrb[0].mxu0
    %v81 = vpop.f32.mrb[0].mxu0
    %v82 = vpop.f32.mrb[0].mxu0
    %83 = vdwg.mxu0
    %vm84 = vcmask 130048
    %85 = vst.msk [vmem:[#allocation2] sm:$0xff] %vm84, %v79
    // Predicated region
    $region14: #{tpu_custom_call.1} parent=1 // pred_check
      _
    $region15: #{tpu_custom_call.1} parent=1 // pred_check_branch
      %87 = sbr.rel (0) target = $region17
    $region16: #{tpu_custom_call.1} parent=1 // pred_region
      %s89 = ssub.s32 128, 128
      %90 = vsyncadd [#allocation3], %s89
      %s92 = sshll.u32 [#allocation2], 4
      %s93 = int_to_ptr.vmem [resolvable:$true] %s92
      %95 = dma.vmem_to_hbm [thread:$0]  %s93, 128, %s3, [#allocation3]
    $region17: #{tpu_custom_call.1} parent=1 // pred_fallthru
      _
    // Predicated region
    $region18: #{tpu_custom_call.1} parent=1 // pred_check
      _
    $region19: #{tpu_custom_call.1} parent=1 // pred_check_branch
      %97 = sbr.rel (0) target = $region21
    $region20: #{tpu_custom_call.1} parent=1 // pred_region
      %98 = dma.done [#allocation3], 128
    $region21: #{tpu_custom_call.1} parent=1 // pred_fallthru
      _
    %99 = vsyncpa [#allocation3], 1

</llo_original>
